<compile_context>
chip_gen: v6e
topology: v6e:2x2x1
jax: 0.10.0
libtpu: 0.0.40
codegen_flags: <defaults>
</compile_context>

<pallas_src>
import functools

import jax
import jax.numpy as jnp
from jax.experimental import pallas as pl
from jax.experimental.pallas import tpu as pltpu

LANE = 128
SUBLANE = 8
CHUNK = SUBLANE * LANE  # 1024 elements = one full (8, 128) vreg tile.


def _round_down(x, m):
    return (x // m) * m


def _default_num_core_slices():
    # Two TensorCores per chip only exist on v7x-class parts; anywhere else
    # (or if detection fails) a second slice is redundant serial work.
    try:
        kind = jax.devices()[0].device_kind.lower()
        if "v7" in kind:
            return 2
    except Exception:
        pass
    return 1


def _rmse_partial_kernel(yhat_ref, y_ref, out_ref, acc_ref, *,
                         tile_rows, blocks_per_slice, full_blocks, valid_rows):
    c = pl.program_id(0)   # core-slice axis ("parallel")
    i = pl.program_id(1)   # reduction axis ("arbitrary")

    @pl.when(i == 0)
    def _init():
        acc_ref[...] = jnp.zeros_like(acc_ref)

    d = yhat_ref[...].astype(jnp.float32) - y_ref[...].astype(jnp.float32)
    sq = d * d

    gb = c * blocks_per_slice + i   # global logical block index

    # Fast path: block lies entirely inside the valid rows -> no mask work.
    @pl.when(gb < full_blocks)
    def _accumulate_full():
        acc_ref[...] += jnp.sum(sq.reshape(-1, SUBLANE, LANE), axis=0)

    # Slow path: the (at most one) partial last block, plus any redundant
    # clamped block assigned to a core slice past the end (contributes 0).
    @pl.when(gb >= full_blocks)
    def _accumulate_masked():
        row = gb * tile_rows + jax.lax.broadcasted_iota(jnp.int32, sq.shape, 0)
        masked = jnp.where(row < valid_rows, sq, 0.0)
        acc_ref[...] += jnp.sum(masked.reshape(-1, SUBLANE, LANE), axis=0)

    @pl.when(i == blocks_per_slice - 1)
    def _finalize():
        out_ref[...] = acc_ref[...].reshape(out_ref.shape)


def rmse_loss(yhat, y, eps=1e-6, tile_rows=8192, num_core_slices=None):
    assert yhat.shape == y.shape, "yhat and y must have the same shape"
    total = int(yhat.size)
    assert total > 0

    a = yhat.reshape(-1)
    b = y.reshape(-1)

    # Handle the (rare) tail that does not fill a full (8, 128) vreg tile with
    # a tiny jnp reduction in the wrapper instead of padding/copying both
    # whole arrays.
    # TODO(synk): fold the tail into the kernel with flat-element masking so
    # the prefix slice below is not materialized for unaligned inputs.
    main = _round_down(total, CHUNK)
    rem = total - main
    if rem:
        ta = a[main:].astype(jnp.float32)
        tb = b[main:].astype(jnp.float32)
        tail_sq = jnp.sum((ta - tb) * (ta - tb))
        a = a[:main]
        b = b[:main]
    else:
        tail_sq = jnp.float32(0.0)

    if main == 0:
        # Fewer than 1024 elements: the wrapper reduction covered everything.
        return jnp.sqrt(tail_sq / jnp.float32(total) + jnp.float32(eps))

    M = main // LANE               # number of 128-lane rows; multiple of 8
    a = a.reshape(M, LANE)
    b = b.reshape(M, LANE)

    itemsize_a = jnp.dtype(a.dtype).itemsize
    itemsize_b = jnp.dtype(b.dtype).itemsize

    # Tile sizing: multiple of 8 rows, no larger than the data, and capped so
    # the double-buffered input working set stays <= 32 MiB (well inside
    # v7x's 64 MiB physical VMEM and v5e/v6e's 128 MiB).
    max_in_bytes = 32 << 20
    cap_rows = max_in_bytes // (2 * 2 * LANE * max(itemsize_a, itemsize_b))
    tile_rows = max(SUBLANE, _round_down(int(tile_rows), SUBLANE))
    tile_rows = min(tile_rows, _round_down(max(cap_rows, SUBLANE), SUBLANE), M)

    nblocks = pl.cdiv(M, tile_rows)
    full_blocks = M // tile_rows   # blocks whose every row is valid

    nslices = int(num_core_slices) if num_core_slices else _default_num_core_slices()
    nslices = max(1, min(nslices, nblocks))
    bps = pl.cdiv(nblocks, nslices)  # reduction blocks per core slice
    grid = (nslices, bps)

    def in_map(c, i):
        # Clamp so the DMA always stays in bounds; out-of-range logical
        # blocks are fully masked in-kernel and contribute zero (at most one
        # redundant tile of HBM traffic when nblocks % nslices != 0).
        return (jnp.minimum(c * bps + i, nblocks - 1), 0)

    kernel = functools.partial(
        _rmse_partial_kernel,
        tile_rows=tile_rows,
        blocks_per_slice=bps,
        full_blocks=full_blocks,
        valid_rows=M,
    )

    # VMEM budget: double-buffered input tiles + double-buffered output block
    # + the single-vreg accumulator, plus headroom for Mosaic internals.
    vmem_bytes = 2 * tile_rows * LANE * (itemsize_a + itemsize_b)
    vmem_bytes += 2 * SUBLANE * LANE * 4
    vmem_bytes += SUBLANE * LANE * 4
    vmem_bytes += 2 << 20

    cost = pl.CostEstimate(
        flops=3 * main,
        transcendentals=0,
        bytes_accessed=main * (itemsize_a + itemsize_b)
        + nslices * SUBLANE * LANE * 4,
    )

    partials = pl.pallas_call(
        kernel,
        out_shape=jax.ShapeDtypeStruct((nslices, SUBLANE, LANE), jnp.float32),
        grid_spec=pltpu.PrefetchScalarGridSpec(
            num_scalar_prefetch=0,
            grid=grid,
            in_specs=[
                pl.BlockSpec((tile_rows, LANE), in_map),
                pl.BlockSpec((tile_rows, LANE), in_map),
            ],
            out_specs=pl.BlockSpec((1, SUBLANE, LANE), lambda c, i: (c, 0, 0)),
            scratch_shapes=[pltpu.VMEM((SUBLANE, LANE), jnp.float32)],
        ),
        compiler_params=pltpu.CompilerParams(
            dimension_semantics=("parallel", "arbitrary"),
            vmem_limit_bytes=int(vmem_bytes),
        ),
        cost_estimate=cost,
    )(a, b)

    total_sq = jnp.sum(partials) + tail_sq
    mse = total_sq / jnp.float32(total)
    return jnp.sqrt(mse + jnp.float32(eps))


if __name__ == "__main__":
    key = jax.random.PRNGKey(0)
    k1, k2, k3, k4, k5, k6 = jax.random.split(key, 6)

    # Primary check: small NCHW inputs (batch=2, channels=4, 16x16).
    shape = (2, 4, 16, 16)
    yhat = jax.random.normal(k1, shape, dtype=jnp.float32)
    y = jax.random.normal(k2, shape, dtype=jnp.float32)
    loss = jax.block_until_ready(rmse_loss(yhat, y, eps=1e-6))
    ref = jnp.sqrt(jnp.mean((yhat - y) ** 2) + 1e-6)
    assert jnp.allclose(loss, ref, rtol=1e-5, atol=1e-6), (loss, ref)

    # Secondary check: small non-dividing tile_rows + two core slices forces
    # multi-step accumulation, the pl.when-gated masked path (partial last
    # block) and the clamped redundant block on the second slice.
    shape2 = (2, 8, 64, 64)
    yhat2 = jax.random.normal(k3, shape2, dtype=jnp.float32)
    y2 = jax.random.normal(k4, shape2, dtype=jnp.float32)
    loss2 = jax.block_until_ready(
        rmse_loss(yhat2, y2, eps=1e-6, tile_rows=48, num_core_slices=2))
    ref2 = jnp.sqrt(jnp.mean((yhat2 - y2) ** 2) + 1e-6)
    assert jnp.allclose(loss2, ref2, rtol=1e-5, atol=1e-6), (loss2, ref2)

    # Third check: total not a multiple of 8*128 exercises the wrapper tail
    # path (no whole-array pad copy).
    shape3 = (7, 300)
    yhat3 = jax.random.normal(k5, shape3, dtype=jnp.float32)
    y3 = jax.random.normal(k6, shape3, dtype=jnp.float32)
    loss3 = jax.block_until_ready(rmse_loss(yhat3, y3, eps=1e-6))
    ref3 = jnp.sqrt(jnp.mean((yhat3 - y3) ** 2) + 1e-6)
    assert jnp.allclose(loss3, ref3, rtol=1e-5, atol=1e-6), (loss3, ref3)

    print("KERNEL_OK")
</pallas_src>

<mosaic_0001>
module attributes {stable_mosaic.version = 11 : i64} {
  func.func @_rmse_partial_kernel(%arg0: i32, %arg1: i32, %arg2: memref<16x128xf32, #tpu.memory_space<vmem>>, %arg3: memref<16x128xf32, #tpu.memory_space<vmem>>, %arg4: memref<1x8x128xf32, #tpu.memory_space<vmem>>, %arg5: memref<8x128xf32, #tpu.memory_space<vmem>>) attributes {dimension_semantics = [#tpu.dimension_semantics<parallel>, #tpu.dimension_semantics<arbitrary>], iteration_bounds = array<i64: 1, 1>, scalar_prefetch = 0 : i64, scratch_operands = 1 : i64, tpu.core_type = #tpu.core_type<tc>, window_params = [{transform_indices = @transform_0, window_bounds = array<i64: 16, 128>}, {transform_indices = @transform_1, window_bounds = array<i64: 16, 128>}, {transform_indices = @transform_2, window_bounds = array<i64: 1, 8, 128>}]} {
    %c0_i32 = arith.constant 0 : i32
    %0 = arith.cmpi eq, %arg1, %c0_i32 : i32
    %1 = arith.extui %0 : i1 to i32
    %c0_i32_0 = arith.constant 0 : i32
    %2 = arith.cmpi ne, %1, %c0_i32_0 : i32
    scf.if %2 {
      %cst = arith.constant 0.000000e+00 : f32
      %18 = vector.broadcast %cst : f32 to vector<8x128xf32>
      %c0_10 = arith.constant 0 : index
      %c0_11 = arith.constant 0 : index
      %19 = vector.load %arg5[%c0_10, %c0_11] : memref<8x128xf32, #tpu.memory_space<vmem>>, vector<8x128xf32>
      tpu.vector_store %arg5[%c0_10, %c0_11], %18 {strides = array<i32>} : memref<8x128xf32, #tpu.memory_space<vmem>>, vector<8x128xf32>,
    } else {
    }
    %c0 = arith.constant 0 : index
    %c0_1 = arith.constant 0 : index
    %3 = vector.load %arg2[%c0, %c0_1] : memref<16x128xf32, #tpu.memory_space<vmem>>, vector<16x128xf32>
    %c0_2 = arith.constant 0 : index
    %c0_3 = arith.constant 0 : index
    %4 = vector.load %arg3[%c0_2, %c0_3] : memref<16x128xf32, #tpu.memory_space<vmem>>, vector<16x128xf32>
    %5 = arith.subf %3, %4 : vector<16x128xf32>
    %6 = arith.mulf %5, %5 : vector<16x128xf32>
    %c1_i32 = arith.constant 1 : i32
    %7 = arith.muli %arg0, %c1_i32 : i32
    %8 = arith.addi %7, %arg1 : i32
    %c1_i32_4 = arith.constant 1 : i32
    %9 = arith.cmpi slt, %8, %c1_i32_4 : i32
    %10 = arith.extui %9 : i1 to i32
    %c0_i32_5 = arith.constant 0 : i32
    %11 = arith.cmpi ne, %10, %c0_i32_5 : i32
    scf.if %11 {
      %c0_10 = arith.constant 0 : index
      %c0_11 = arith.constant 0 : index
      %18 = vector.load %arg5[%c0_10, %c0_11] : memref<8x128xf32, #tpu.memory_space<vmem>>, vector<8x128xf32>
      %19 = vector.shape_cast %6 : vector<16x128xf32> to vector<2x8x128xf32>
      %cst = arith.constant dense<0.000000e+00> : vector<8x128xf32>
      %20 = vector.multi_reduction <add>, %19, %cst [0] : vector<2x8x128xf32> to vector<8x128xf32>
      %21 = arith.addf %18, %20 : vector<8x128xf32>
      %c0_12 = arith.constant 0 : index
      %c0_13 = arith.constant 0 : index
      %22 = vector.load %arg5[%c0_12, %c0_13] : memref<8x128xf32, #tpu.memory_space<vmem>>, vector<8x128xf32>
      tpu.vector_store %arg5[%c0_12, %c0_13], %21 {strides = array<i32>} : memref<8x128xf32, #tpu.memory_space<vmem>>, vector<8x128xf32>,
    } else {
    }
    %c1_i32_6 = arith.constant 1 : i32
    %12 = arith.cmpi sge, %8, %c1_i32_6 : i32
    %13 = arith.extui %12 : i1 to i32
    %c0_i32_7 = arith.constant 0 : i32
    %14 = arith.cmpi ne, %13, %c0_i32_7 : i32
    scf.if %14 {
      %c16_i32 = arith.constant 16 : i32
      %18 = arith.muli %8, %c16_i32 : i32
      %19 = tpu.iota {dimensions = array<i32: 0>} : vector<16x128xi32>
      %20 = vector.broadcast %18 : i32 to vector<16x128xi32>
      %21 = arith.addi %20, %19 : vector<16x128xi32>
      %c16_i32_10 = arith.constant 16 : i32
      %22 = vector.broadcast %c16_i32_10 : i32 to vector<16x128xi32>
      %23 = arith.cmpi slt, %21, %22 : vector<16x128xi32>
      %cst = arith.constant 0.000000e+00 : f32
      %24 = vector.broadcast %cst : f32 to vector<16x128xf32>
      %25 = arith.select %23, %6, %24 : vector<16x128xi1>, vector<16x128xf32>
      %c0_11 = arith.constant 0 : index
      %c0_12 = arith.constant 0 : index
      %26 = vector.load %arg5[%c0_11, %c0_12] : memref<8x128xf32, #tpu.memory_space<vmem>>, vector<8x128xf32>
      %27 = vector.shape_cast %25 : vector<16x128xf32> to vector<2x8x128xf32>
      %cst_13 = arith.constant dense<0.000000e+00> : vector<8x128xf32>
      %28 = vector.multi_reduction <add>, %27, %cst_13 [0] : vector<2x8x128xf32> to vector<8x128xf32>
      %29 = arith.addf %26, %28 : vector<8x128xf32>
      %c0_14 = arith.constant 0 : index
      %c0_15 = arith.constant 0 : index
      %30 = vector.load %arg5[%c0_14, %c0_15] : memref<8x128xf32, #tpu.memory_space<vmem>>, vector<8x128xf32>
      tpu.vector_store %arg5[%c0_14, %c0_15], %29 {strides = array<i32>} : memref<8x128xf32, #tpu.memory_space<vmem>>, vector<8x128xf32>,
    } else {
    }
    %c0_i32_8 = arith.constant 0 : i32
    %15 = arith.cmpi eq, %arg1, %c0_i32_8 : i32
    %16 = arith.extui %15 : i1 to i32
    %c0_i32_9 = arith.constant 0 : i32
    %17 = arith.cmpi ne, %16, %c0_i32_9 : i32
    scf.if %17 {
      %c0_10 = arith.constant 0 : index
      %c0_11 = arith.constant 0 : index
      %18 = vector.load %arg5[%c0_10, %c0_11] : memref<8x128xf32, #tpu.memory_space<vmem>>, vector<8x128xf32>
      %19 = vector.shape_cast %18 : vector<8x128xf32> to vector<1x8x128xf32>
      %c0_12 = arith.constant 0 : index
      %c0_13 = arith.constant 0 : index
      %c0_14 = arith.constant 0 : index
      %20 = vector.load %arg4[%c0_12, %c0_13, %c0_14] : memref<1x8x128xf32, #tpu.memory_space<vmem>>, vector<1x8x128xf32>
      tpu.vector_store %arg4[%c0_12, %c0_13, %c0_14], %19 {strides = array<i32>} : memref<1x8x128xf32, #tpu.memory_space<vmem>>, vector<1x8x128xf32>,
    } else {
    }
    return
  }
  func.func @transform_0(%arg0: i32, %arg1: i32) -> (i32, i32) {
    %c1_i32 = arith.constant 1 : i32
    %0 = arith.muli %arg0, %c1_i32 : i32
    %1 = arith.addi %0, %arg1 : i32
    %c0_i32 = arith.constant 0 : i32
    %2 = arith.minsi %1, %c0_i32 : i32
    %c0_i32_0 = arith.constant 0 : i32
    %c0_i32_1 = arith.constant 0 : i32
    return %2, %c0_i32_0 : i32, i32
  }
  func.func @transform_1(%arg0: i32, %arg1: i32) -> (i32, i32) {
    %c1_i32 = arith.constant 1 : i32
    %0 = arith.muli %arg0, %c1_i32 : i32
    %1 = arith.addi %0, %arg1 : i32
    %c0_i32 = arith.constant 0 : i32
    %2 = arith.minsi %1, %c0_i32 : i32
    %c0_i32_0 = arith.constant 0 : i32
    %c0_i32_1 = arith.constant 0 : i32
    return %2, %c0_i32_0 : i32, i32
  }
  func.func @transform_2(%arg0: i32, %arg1: i32) -> (i32, i32, i32) {
    %c0_i32 = arith.constant 0 : i32
    %c0_i32_0 = arith.constant 0 : i32
    %c0_i32_1 = arith.constant 0 : i32
    return %arg0, %c0_i32, %c0_i32_0 : i32, i32, i32
  }
}

</mosaic_0001>

<llo_original>
// kernel: tpu_custom_call.1
$region0: #{tpu_custom_call.1}
  #allocation0 [shape = 'u32[]', space=smem, size = 0x4, offset = 0x4, fixed_abs, tag = 'smem constant byte address 0x4 - core index']
  #allocation1 [shape = 'u32[144,128]{1,0:T(1,128)}', space=vmem, size = 0x12000, scoped, tag = 'internal scratch']
  #allocation2 [shape = 'f32[8,128]{1,0:T(8,128)}', space=vmem, size = 0x1000, scoped, tag = 'scratch operand']
  %s0 = inlined_call_operand.hbm [shape: f32[16,128], index: 0, kind: input, shape index: {}]
  %s1 = inlined_call_operand.hbm [shape: f32[16,128], index: 1, kind: input, shape index: {}]
  %s2 = inlined_call_operand.hbm [shape: f32[1,8,128], index: 2, kind: output, shape index: {}]
  %s3 = sld [smem:[#allocation0]]
  $region42: #{tpu_custom_call.1} parent=0
    _
  %s5 = ssub.s32 1, %s3
  %s6 = scalar_select 0, %s5, %s3
  $region1: #{tpu_custom_call.1} parent=0
    #allocation3 [shape = 'u8[8192]{0}', space=vmem, size = 0x2000, scoped, tag = 'input window, operand 0, single buffered']
    #allocation4 [shape = 's32[1]{0}', space=sflag, size = 0x4, scoped, tag = 'scoped memory for tpu_custom_call.1']
    #allocation5 [shape = 's32[1]{0}', space=sflag, size = 0x4, scoped, tag = 'scoped memory for tpu_custom_call.1']
    #allocation6 [shape = 'u8[8192]{0}', space=vmem, size = 0x2000, scoped, tag = 'input window, operand 1, single buffered']
    #allocation7 [shape = 's32[1]{0}', space=sflag, size = 0x4, scoped, tag = 'scoped memory for tpu_custom_call.1']
    #allocation8 [shape = 'u8[4096]{0}', space=vmem, size = 0x1000, scoped, tag = 'output window, operand 0, single buffered']
    %7 = vsyncpa [#allocation4], 0
    %8 = vsyncpa [#allocation7], 0
    %9 = vsyncpa [#allocation5], 0
    // Predicated region
    $region2: #{tpu_custom_call.1} parent=1 // pred_check
      _
    $region3: #{tpu_custom_call.1} parent=1 // pred_check_branch
      %11 = sbr.rel (0) target = $region5
    $region4: #{tpu_custom_call.1} parent=1 // pred_region
      %s12 = sadd.s32 0, 0
      %p13 = scmp.lt.s32.totalorder %s12, 0
      %s14 = scalar_select %p13, %s12, 0
      %s15 = smul.u32 2, %s14
      %s17 = ssub.s32 256, 256
      %18 = vsyncadd [#allocation4], %s17
      %s19 = smul.addr %s15, 128
      %s20 = scalar_lea.hbm %s0, %s19
      %s21 = sshll.u32 [#allocation3], 4
      %s22 = int_to_ptr.vmem [resolvable:$true] %s21
      %27 = dma.hbm_to_vmem [thread:$0]  %s20, 256, %s22, [#allocation4], 128, 128, 8
    $region5: #{tpu_custom_call.1} parent=1 // pred_fallthru
      _
    // Predicated region
    $region6: #{tpu_custom_call.1} parent=1 // pred_check
      _
    $region7: #{tpu_custom_call.1} parent=1 // pred_check_branch
      %29 = sbr.rel (0) target = $region9
    $region8: #{tpu_custom_call.1} parent=1 // pred_region
      %s30 = sadd.s32 0, 0
      %p31 = scmp.lt.s32.totalorder %s30, 0
      %s32 = scalar_select %p31, %s30, 0
      %s33 = smul.u32 2, %s32
      %s35 = ssub.s32 256, 256
      %36 = vsyncadd [#allocation7], %s35
      %s37 = smul.addr %s33, 128
      %s38 = scalar_lea.hbm %s1, %s37
      %s39 = sshll.u32 [#allocation6], 4
      %s40 = int_to_ptr.vmem [resolvable:$true] %s39
      %45 = dma.hbm_to_vmem [thread:$0]  %s38, 256, %s40, [#allocation7], 128, 128, 8
    $region9: #{tpu_custom_call.1} parent=1 // pred_fallthru
      _
    // Predicated region
    $region10: #{tpu_custom_call.1} parent=1 // pred_check
      _
    $region11: #{tpu_custom_call.1} parent=1 // pred_check_branch
      %47 = sbr.rel (0) target = $region13
    $region12: #{tpu_custom_call.1} parent=1 // pred_region
      %48 = dma.done [#allocation4], 256
    $region13: #{tpu_custom_call.1} parent=1 // pred_fallthru
      _
    // Predicated region
    $region14: #{tpu_custom_call.1} parent=1 // pred_check
      _
    $region15: #{tpu_custom_call.1} parent=1 // pred_check_branch
      %50 = sbr.rel (0) target = $region17
    $region16: #{tpu_custom_call.1} parent=1 // pred_region
      %51 = dma.done [#allocation7], 256
    $region17: #{tpu_custom_call.1} parent=1 // pred_fallthru
      _
    %s52 = sadd.s32 0, 0
    %p53 = scmp.lt.s32.totalorder %s52, 0
    %s54 = scalar_select %p53, %s52, 0
    %s55 = smul.u32 2, %s54
    %s56 = sadd.s32 0, 0
    %p57 = scmp.lt.s32.totalorder %s56, 0
    %s58 = scalar_select %p57, %s56, 0
    %s59 = smul.u32 2, %s58
    %p60 = scmp.eq.s32.totalorder 0, 0
    // Predicated region
    $region18: #{tpu_custom_call.1} parent=1 // pred_check
      %p61 = pneg %p60
    $region19: #{tpu_custom_call.1} parent=1 // pred_check_branch
      %63 = sbr.rel (%p61) target = $region21
    $region20: #{tpu_custom_call.1} parent=1 // pred_region
      %64 = vst [vmem:[#allocation2] sm:$0xff] 0.0
    $region21: #{tpu_custom_call.1} parent=1 // pred_fallthru
      _
    %v65 = vld [vmem:[#allocation3] sm:$0xff]
    %v66 = vld [vmem:[#allocation3 + $0x8] sm:$0xff]
    %v67 = vld [vmem:[#allocation6] sm:$0xff]
    %v68 = vld [vmem:[#allocation6 + $0x8] sm:$0xff]
    %v69 = vsub.f32 %v65, %v67
    %v70 = vsub.f32 %v66, %v68
    %v71 = vmul.f32 %v69, %v69
    %v72 = vmul.f32 %v70, %v70
    %s73 = sadd.s32 0, 0
    %p74 = scmp.lt.s32.totalorder %s73, 1
    // Predicated region
    $region22: #{tpu_custom_call.1} parent=1 // pred_check
      %p75 = pneg %p74
    $region23: #{tpu_custom_call.1} parent=1 // pred_check_branch
      %77 = sbr.rel (%p75) target = $region25
    $region24: #{tpu_custom_call.1} parent=1 // pred_region
      %v78 = vld [vmem:[#allocation2] sm:$0xff]
      %v79 = vadd.f32 %v71, %v72
      %v80 = vadd.f32 %v78, %v79
      %81 = vst [vmem:[#allocation2] sm:$0xff] %v80
    $region25: #{tpu_custom_call.1} parent=1 // pred_fallthru
      _
    %p82 = scmp.ge.s32.totalorder %s73, 1
    // Predicated region
    $region26: #{tpu_custom_call.1} parent=1 // pred_check
      %p83 = pneg %p82
    $region27: #{tpu_custom_call.1} parent=1 // pred_check_branch
      %85 = sbr.rel (%p83) target = $region29
    $region28: #{tpu_custom_call.1} parent=1 // pred_region
      %s86 = smul.u32 %s73, 16
      %v87 = vlaneseq
      %v88 = vshrl.u32 %v87, 7
      %v89 = vadd.s32 %v88, 8
      %v90 = vstv %s86
      %v91 = vadd.s32 %v90, %v88
      %v92 = vadd.s32 %v90, %v89
      %vm93 = vcmp.lt.s32.totalorder %v91, 16
      %vm94 = vcmp.lt.s32.totalorder %v92, 16
      %v95 = vsel %vm93, %v71, 0.0
      %v96 = vsel %vm94, %v72, 0.0
      %v97 = vld [vmem:[#allocation2] sm:$0xff]
      %v98 = vadd.f32 %v95, %v96
      %v99 = vadd.f32 %v97, %v98
      %100 = vst [vmem:[#allocation2] sm:$0xff] %v99
    $region29: #{tpu_custom_call.1} parent=1 // pred_fallthru
      _
    // Predicated region
    $region30: #{tpu_custom_call.1} parent=1 // pred_check
      %p101 = pneg %p60
    $region31: #{tpu_custom_call.1} parent=1 // pred_check_branch
      %103 = sbr.rel (%p101) target = $region33
    $region32: #{tpu_custom_call.1} parent=1 // pred_region
      %v104 = vld [vmem:[#allocation2] sm:$0xff]
      %105 = vst [vmem:[#allocation8] sm:$0xff] %v104
    $region33: #{tpu_custom_call.1} parent=1 // pred_fallthru
      _
    // Predicated region
    $region34: #{tpu_custom_call.1} parent=1 // pred_check
      _
    $region35: #{tpu_custom_call.1} parent=1 // pred_check_branch
      %107 = sbr.rel (0) target = $region37
    $region36: #{tpu_custom_call.1} parent=1 // pred_region
      %s109 = ssub.s32 128, 128
      %110 = vsyncadd [#allocation5], %s109
      %s112 = sshll.u32 [#allocation8], 4
      %s113 = int_to_ptr.vmem [resolvable:$true] %s112
      %115 = dma.vmem_to_hbm [thread:$0]  %s113, 128, %s2, [#allocation5]
    $region37: #{tpu_custom_call.1} parent=1 // pred_fallthru
      _
    // Predicated region
    $region38: #{tpu_custom_call.1} parent=1 // pred_check
      _
    $region39: #{tpu_custom_call.1} parent=1 // pred_check_branch
      %117 = sbr.rel (0) target = $region41
    $region40: #{tpu_custom_call.1} parent=1 // pred_region
      %118 = dma.done [#allocation5], 128
    $region41: #{tpu_custom_call.1} parent=1 // pred_fallthru
      _
    %119 = vsyncpa [#allocation4], 1
    %120 = vsyncpa [#allocation7], 1
    %121 = vsyncpa [#allocation5], 1

</llo_original>
